<compile_context>
chip_gen: v5e
topology: v5e:2x2
jax: 0.10.0
libtpu: 0.0.40
codegen_flags: <defaults>
</compile_context>

<pallas_src>
import functools
import math

import jax
import jax.numpy as jnp
from jax.experimental import pallas as pl
from jax.experimental.pallas import tpu as pltpu


def _round_up(x, m):
    return ((x + m - 1) // m) * m


def _nbytes(shape, dtype):
    n = 1
    for d in shape:
        n *= int(d)
    return n * jnp.dtype(dtype).itemsize


def _resident_block_spec(shape, index_map):
    """Grid-invariant block (weights / biases): request single buffering.

    Double-buffering a block whose index_map is constant over the grid buys
    nothing and doubles its VMEM footprint (the difference between fitting and
    not fitting v7x's 64 MiB / v5e's 16 MiB default scoped limit)."""
    try:
        return pl.BlockSpec(shape, index_map, pipeline_mode=pl.Buffered(1))
    except (TypeError, ValueError):  # older BlockSpec signature / constraint
        return pl.BlockSpec(shape, index_map)


def _fused_mlp_kernel(x_ref, *refs, num_layers):
    """Run one batch tile through the whole MLP; activations never leave VMEM.

    x_ref : (tm, in_p)   padded activations, compute dtype (bf16 or f32)
    refs  : w0, b0, w1, b1, ...   per-layer padded weights (fi_p, fo_p) in the
                                  compute dtype and biases (1, fo_p) in f32,
            o_ref (tm, out_p)     output tile (original input dtype),
            h_ref (tm, hid_p)     VMEM scratch staging inter-layer activations
                                  (bounds vreg live ranges of the unroll).
    """
    o_ref = refs[2 * num_layers]
    h_ref = refs[2 * num_layers + 1]

    h = x_ref[...]
    for layer in range(num_layers):                 # static unroll; L is small
        w_ref = refs[2 * layer]
        b_ref = refs[2 * layer + 1]
        # MXU matmul in the compute dtype (bf16 on v5e/v6e/v7x), f32 accumulate.
        y = jnp.dot(h, w_ref[...], preferred_element_type=jnp.float32)
        y = y + b_ref[...]                          # bias add on f32 accumulator
        if layer < num_layers - 1:
            w_out = w_ref.shape[1]
            # tanh on the f32 accumulator (EUP), then stage the activation
            # through VMEM so the next matmul streams its LHS from VMEM
            # instead of spilling vregs across the unrolled loop.
            h_ref[:, :w_out] = jnp.tanh(y).astype(h_ref.dtype)
            h = h_ref[:, :w_out]
        else:
            o_ref[...] = y.astype(o_ref.dtype)      # final layer stays linear


def prepare_mlp_params(params, compute_dtype=jnp.bfloat16):
    """Zero-pad every layer to its own lane-dense (multiple-of-128) shape.

    Weights are stored in `compute_dtype` (bf16 feeds the MXU at full rate and
    halves weight VMEM/HBM traffic); biases stay f32 (added on the f32
    accumulator).  Call once and reuse across forward calls — the padded copies
    should not be rebuilt on the per-call path."""
    prepared = []
    for (w, b) in params:
        fi, fo = w.shape
        fi_p, fo_p = _round_up(fi, 128), _round_up(fo, 128)
        w_p = jnp.zeros((fi_p, fo_p), compute_dtype).at[:fi, :fo].set(
            w.astype(compute_dtype))
        b_p = jnp.zeros((1, fo_p), jnp.float32).at[0, :fo].set(
            b.astype(jnp.float32))
        prepared.append((w_p, b_p))
    return prepared


def mlp_tanh_forward(x, params, prepared=None, *, tile_m=256,
                     compute_dtype=jnp.bfloat16):
    """x: (B, input_size); params: list of (w[in,out], b[out]) -> (B, out_size)."""
    if prepared is None:
        prepared = prepare_mlp_params(params, compute_dtype)
    compute_dtype = prepared[0][0].dtype
    out_dtype = x.dtype

    B, in_size = x.shape
    num_layers = len(params)
    out_size = params[-1][0].shape[1]
    in_p = prepared[0][0].shape[0]
    out_p = prepared[-1][0].shape[1]
    # Width of the intermediate (post-tanh) activations held in VMEM scratch.
    hid_p = max([w_p.shape[1] for (w_p, _) in prepared[:-1]], default=128)

    # Batch tile: round B up to the sublane (8) only — never inflate small
    # batches to 128; large batches use big tiles to amortize the ~0.35 us/step
    # grid overhead.  (On v7x, >=2 tiles lets the "parallel" axis shard across
    # the two TensorCores, each keeping its own resident weight copy.)
    tm = min(tile_m, _round_up(B, 8))
    B_pad = _round_up(B, tm)
    num_tiles = B_pad // tm

    x_pad = jnp.pad(x, ((0, B_pad - B), (0, in_p - in_size))).astype(compute_dtype)

    # VMEM footprint: single-buffered resident weights/biases + double-buffered
    # activation/output tiles + the inter-layer scratch; derive vmem limit.
    weight_bytes = sum(_nbytes(w.shape, w.dtype) + _nbytes(b.shape, b.dtype)
                       for (w, b) in prepared)
    act_bytes = 2 * _nbytes((tm, in_p), compute_dtype)
    out_bytes = 2 * _nbytes((tm, out_p), out_dtype)
    scratch_bytes = _nbytes((tm, hid_p), compute_dtype)
    footprint = weight_bytes + act_bytes + out_bytes + scratch_bytes
    try:
        vmem_cap = pltpu.get_tpu_info().vmem_capacity_bytes
    except Exception:
        vmem_cap = 64 * 1024 * 1024      # v7x per-core floor; safe everywhere
    vmem_limit = max(16 * 1024 * 1024,
                     min(int(footprint * 1.25) + (2 << 20), int(vmem_cap * 0.9)))

    # Advisory cost estimate so XLA schedules surrounding ops sensibly.
    flops = 2 * B_pad * sum(int(w.shape[0]) * int(w.shape[1]) for (w, _) in prepared)
    transcendentals = B_pad * sum(int(w.shape[1]) for (w, _) in prepared[:-1])
    bytes_accessed = (_nbytes(x_pad.shape, compute_dtype) + weight_bytes
                      + _nbytes((B_pad, out_p), out_dtype))

    in_specs = [pl.BlockSpec((tm, in_p), lambda i: (i, 0))]
    operands = [x_pad]
    for (w_p, b_p) in prepared:
        in_specs.append(_resident_block_spec(w_p.shape, lambda i: (0, 0)))
        in_specs.append(_resident_block_spec(b_p.shape, lambda i: (0, 0)))
        operands.extend([w_p, b_p])

    kernel = functools.partial(_fused_mlp_kernel, num_layers=num_layers)
    out_pad = pl.pallas_call(
        kernel,
        out_shape=jax.ShapeDtypeStruct((B_pad, out_p), out_dtype),
        grid=(num_tiles,),
        in_specs=in_specs,
        out_specs=pl.BlockSpec((tm, out_p), lambda i: (i, 0)),
        scratch_shapes=[pltpu.VMEM((tm, hid_p), compute_dtype)],
        compiler_params=pltpu.CompilerParams(
            dimension_semantics=("parallel",),
            vmem_limit_bytes=vmem_limit,
        ),
        cost_estimate=pl.CostEstimate(
            flops=flops, transcendentals=transcendentals,
            bytes_accessed=bytes_accessed),
    )(*operands)
    # TODO(synk): when weight_bytes no longer fits the VMEM budget (very wide
    # hidden layers, esp. v7x's 64 MiB), switch to a (batch_tiles, num_layers)
    # grid that streams one weight block per layer (pl.Buffered(2-3)), keeps
    # the activation in a persistent VMEM scratch across the layer axis, and
    # stores the output under pl.when(layer == num_layers - 1).
    return out_pad[:B, :out_size]


def init_mlp_params(key, input_size, hidden_size, output_size, num_hidden_layers,
                    dtype=jnp.float32):
    """Deterministic kaiming-uniform-ish init (tanh gain = 5/3), zero biases.
    Weights stored as [in, out] (transposed from PyTorch's [out, in])."""
    sizes = [(input_size, hidden_size)]
    sizes += [(hidden_size, hidden_size) for _ in range(num_hidden_layers - 1)]
    sizes += [(hidden_size, output_size)]
    params = []
    gain = 5.0 / 3.0
    for (fan_in, fan_out) in sizes:
        key, wk = jax.random.split(key)
        bound = gain * math.sqrt(3.0 / fan_in)
        w = jax.random.uniform(wk, (fan_in, fan_out), dtype=dtype,
                               minval=-bound, maxval=bound)
        b = jnp.zeros((fan_out,), dtype=dtype)
        params.append((w, b))
    return params


def mlp_tanh_reference(x, params):
    """Plain-JAX reference matching MLP_Tanh.forward (tanh on all but last layer)."""
    n = len(params)
    h = x
    for i, (w, b) in enumerate(params):
        h = h @ w + b
        if i < n - 1:
            h = jnp.tanh(h)
    return h


if __name__ == "__main__":
    # Shapes consistent with the module: input layer + (num_hidden_layers-1)
    # hidden layers + output layer.
    batch = 8
    input_size = 32
    hidden_size = 32
    output_size = 16
    num_hidden_layers = 3

    key = jax.random.PRNGKey(0)
    key, xk = jax.random.split(key)
    x = jax.random.normal(xk, (batch, input_size), dtype=jnp.float32)
    params = init_mlp_params(key, input_size, hidden_size, output_size,
                             num_hidden_layers)
    ref = mlp_tanh_reference(x, params)

    # bf16-MXU path (default): f32 accumulate, loose tolerance vs f32 reference.
    prepared_bf16 = prepare_mlp_params(params, jnp.bfloat16)
    out_bf16 = jax.block_until_ready(mlp_tanh_forward(x, params, prepared_bf16))
    assert out_bf16.shape == (batch, output_size)
    assert jnp.allclose(out_bf16, ref, atol=5e-2, rtol=5e-2), (
        float(jnp.max(jnp.abs(out_bf16 - ref))))

    # f32 path: strict check.
    prepared_f32 = prepare_mlp_params(params, jnp.float32)
    out_f32 = jax.block_until_ready(mlp_tanh_forward(x, params, prepared_f32))
    assert jnp.allclose(out_f32, ref, atol=1e-4, rtol=1e-4)

    # Multi-tile grid: exercises batch tiling, padded-row discard, parallel axis.
    key, xk2 = jax.random.split(key)
    x2 = jax.random.normal(xk2, (40, input_size), dtype=jnp.float32)
    out2 = jax.block_until_ready(
        mlp_tanh_forward(x2, params, prepared_bf16, tile_m=16))
    ref2 = mlp_tanh_reference(x2, params)
    assert out2.shape == (40, output_size)
    assert jnp.allclose(out2, ref2, atol=5e-2, rtol=5e-2)

    print("KERNEL_OK")
</pallas_src>

<mosaic_0001>
module attributes {stable_mosaic.version = 11 : i64} {
  func.func @_fused_mlp_kernel(%arg0: i32, %arg1: memref<8x128xbf16, #tpu.memory_space<vmem>>, %arg2: memref<128x128xbf16, #tpu.memory_space<vmem>>, %arg3: memref<1x128xf32, #tpu.memory_space<vmem>>, %arg4: memref<128x128xbf16, #tpu.memory_space<vmem>>, %arg5: memref<1x128xf32, #tpu.memory_space<vmem>>, %arg6: memref<128x128xbf16, #tpu.memory_space<vmem>>, %arg7: memref<1x128xf32, #tpu.memory_space<vmem>>, %arg8: memref<128x128xbf16, #tpu.memory_space<vmem>>, %arg9: memref<1x128xf32, #tpu.memory_space<vmem>>, %arg10: memref<8x128xf32, #tpu.memory_space<vmem>>, %arg11: memref<8x128xbf16, #tpu.memory_space<vmem>>) attributes {dimension_semantics = [#tpu.dimension_semantics<parallel>], iteration_bounds = array<i64: 1>, scalar_prefetch = 0 : i64, scratch_operands = 1 : i64, tpu.core_type = #tpu.core_type<tc>, window_params = [{transform_indices = @transform_0, window_bounds = array<i64: 8, 128>}, {pipeline_mode = #tpu.pipeline_mode<synchronous>, transform_indices = @transform_1, window_bounds = array<i64: 128, 128>}, {pipeline_mode = #tpu.pipeline_mode<synchronous>, transform_indices = @transform_2, window_bounds = array<i64: 1, 128>}, {pipeline_mode = #tpu.pipeline_mode<synchronous>, transform_indices = @transform_3, window_bounds = array<i64: 128, 128>}, {pipeline_mode = #tpu.pipeline_mode<synchronous>, transform_indices = @transform_4, window_bounds = array<i64: 1, 128>}, {pipeline_mode = #tpu.pipeline_mode<synchronous>, transform_indices = @transform_5, window_bounds = array<i64: 128, 128>}, {pipeline_mode = #tpu.pipeline_mode<synchronous>, transform_indices = @transform_6, window_bounds = array<i64: 1, 128>}, {pipeline_mode = #tpu.pipeline_mode<synchronous>, transform_indices = @transform_7, window_bounds = array<i64: 128, 128>}, {pipeline_mode = #tpu.pipeline_mode<synchronous>, transform_indices = @transform_8, window_bounds = array<i64: 1, 128>}, {transform_indices = @transform_9, window_bounds = array<i64: 8, 128>}]} {
    %c0 = arith.constant 0 : index
    %c0_0 = arith.constant 0 : index
    %0 = vector.load %arg1[%c0, %c0_0] : memref<8x128xbf16, #tpu.memory_space<vmem>>, vector<8x128xbf16>
    %c0_1 = arith.constant 0 : index
    %c0_2 = arith.constant 0 : index
    %1 = vector.load %arg2[%c0_1, %c0_2] : memref<128x128xbf16, #tpu.memory_space<vmem>>, vector<128x128xbf16>
    %cst = arith.constant dense<0.000000e+00> : vector<8x128xf32>
    %2 = tpu.matmul %0, %1, %cst {dimension_numbers = #tpu.dot_dimension_numbers<[1], [0], [0], [1], [0, 0, 1, 1], [], []>} : vector<8x128xbf16>, vector<128x128xbf16>, vector<8x128xf32> -> vector<8x128xf32>
    %c0_3 = arith.constant 0 : index
    %c0_4 = arith.constant 0 : index
    %3 = vector.load %arg3[%c0_3, %c0_4] : memref<1x128xf32, #tpu.memory_space<vmem>>, vector<1x128xf32>
    %4 = vector.broadcast %3 : vector<1x128xf32> to vector<8x128xf32>
    %5 = arith.addf %2, %4 : vector<8x128xf32>
    %6 = math.tanh %5 : vector<8x128xf32>
    %7 = arith.truncf %6 : vector<8x128xf32> to vector<8x128xbf16>
    %c0_5 = arith.constant 0 : index
    %c0_6 = arith.constant 0 : index
    %8 = vector.load %arg11[%c0_5, %c0_6] : memref<8x128xbf16, #tpu.memory_space<vmem>>, vector<8x128xbf16>
    tpu.vector_store %arg11[%c0_5, %c0_6], %7 {strides = array<i32>} : memref<8x128xbf16, #tpu.memory_space<vmem>>, vector<8x128xbf16>,
    %c0_7 = arith.constant 0 : index
    %c0_8 = arith.constant 0 : index
    %9 = vector.load %arg11[%c0_7, %c0_8] : memref<8x128xbf16, #tpu.memory_space<vmem>>, vector<8x128xbf16>
    %c0_9 = arith.constant 0 : index
    %c0_10 = arith.constant 0 : index
    %10 = vector.load %arg4[%c0_9, %c0_10] : memref<128x128xbf16, #tpu.memory_space<vmem>>, vector<128x128xbf16>
    %cst_11 = arith.constant dense<0.000000e+00> : vector<8x128xf32>
    %11 = tpu.matmul %9, %10, %cst_11 {dimension_numbers = #tpu.dot_dimension_numbers<[1], [0], [0], [1], [0, 0, 1, 1], [], []>} : vector<8x128xbf16>, vector<128x128xbf16>, vector<8x128xf32> -> vector<8x128xf32>
    %c0_12 = arith.constant 0 : index
    %c0_13 = arith.constant 0 : index
    %12 = vector.load %arg5[%c0_12, %c0_13] : memref<1x128xf32, #tpu.memory_space<vmem>>, vector<1x128xf32>
    %13 = vector.broadcast %12 : vector<1x128xf32> to vector<8x128xf32>
    %14 = arith.addf %11, %13 : vector<8x128xf32>
    %15 = math.tanh %14 : vector<8x128xf32>
    %16 = arith.truncf %15 : vector<8x128xf32> to vector<8x128xbf16>
    %c0_14 = arith.constant 0 : index
    %c0_15 = arith.constant 0 : index
    %17 = vector.load %arg11[%c0_14, %c0_15] : memref<8x128xbf16, #tpu.memory_space<vmem>>, vector<8x128xbf16>
    tpu.vector_store %arg11[%c0_14, %c0_15], %16 {strides = array<i32>} : memref<8x128xbf16, #tpu.memory_space<vmem>>, vector<8x128xbf16>,
    %c0_16 = arith.constant 0 : index
    %c0_17 = arith.constant 0 : index
    %18 = vector.load %arg11[%c0_16, %c0_17] : memref<8x128xbf16, #tpu.memory_space<vmem>>, vector<8x128xbf16>
    %c0_18 = arith.constant 0 : index
    %c0_19 = arith.constant 0 : index
    %19 = vector.load %arg6[%c0_18, %c0_19] : memref<128x128xbf16, #tpu.memory_space<vmem>>, vector<128x128xbf16>
    %cst_20 = arith.constant dense<0.000000e+00> : vector<8x128xf32>
    %20 = tpu.matmul %18, %19, %cst_20 {dimension_numbers = #tpu.dot_dimension_numbers<[1], [0], [0], [1], [0, 0, 1, 1], [], []>} : vector<8x128xbf16>, vector<128x128xbf16>, vector<8x128xf32> -> vector<8x128xf32>
    %c0_21 = arith.constant 0 : index
    %c0_22 = arith.constant 0 : index
    %21 = vector.load %arg7[%c0_21, %c0_22] : memref<1x128xf32, #tpu.memory_space<vmem>>, vector<1x128xf32>
    %22 = vector.broadcast %21 : vector<1x128xf32> to vector<8x128xf32>
    %23 = arith.addf %20, %22 : vector<8x128xf32>
    %24 = math.tanh %23 : vector<8x128xf32>
    %25 = arith.truncf %24 : vector<8x128xf32> to vector<8x128xbf16>
    %c0_23 = arith.constant 0 : index
    %c0_24 = arith.constant 0 : index
    %26 = vector.load %arg11[%c0_23, %c0_24] : memref<8x128xbf16, #tpu.memory_space<vmem>>, vector<8x128xbf16>
    tpu.vector_store %arg11[%c0_23, %c0_24], %25 {strides = array<i32>} : memref<8x128xbf16, #tpu.memory_space<vmem>>, vector<8x128xbf16>,
    %c0_25 = arith.constant 0 : index
    %c0_26 = arith.constant 0 : index
    %27 = vector.load %arg11[%c0_25, %c0_26] : memref<8x128xbf16, #tpu.memory_space<vmem>>, vector<8x128xbf16>
    %c0_27 = arith.constant 0 : index
    %c0_28 = arith.constant 0 : index
    %28 = vector.load %arg8[%c0_27, %c0_28] : memref<128x128xbf16, #tpu.memory_space<vmem>>, vector<128x128xbf16>
    %cst_29 = arith.constant dense<0.000000e+00> : vector<8x128xf32>
    %29 = tpu.matmul %27, %28, %cst_29 {dimension_numbers = #tpu.dot_dimension_numbers<[1], [0], [0], [1], [0, 0, 1, 1], [], []>} : vector<8x128xbf16>, vector<128x128xbf16>, vector<8x128xf32> -> vector<8x128xf32>
    %c0_30 = arith.constant 0 : index
    %c0_31 = arith.constant 0 : index
    %30 = vector.load %arg9[%c0_30, %c0_31] : memref<1x128xf32, #tpu.memory_space<vmem>>, vector<1x128xf32>
    %31 = vector.broadcast %30 : vector<1x128xf32> to vector<8x128xf32>
    %32 = arith.addf %29, %31 : vector<8x128xf32>
    %c0_32 = arith.constant 0 : index
    %c0_33 = arith.constant 0 : index
    %33 = vector.load %arg10[%c0_32, %c0_33] : memref<8x128xf32, #tpu.memory_space<vmem>>, vector<8x128xf32>
    tpu.vector_store %arg10[%c0_32, %c0_33], %32 {strides = array<i32>} : memref<8x128xf32, #tpu.memory_space<vmem>>, vector<8x128xf32>,
    return
  }
  func.func @transform_0(%arg0: i32) -> (i32, i32) {
    %c0_i32 = arith.constant 0 : i32
    %c0_i32_0 = arith.constant 0 : i32
    return %arg0, %c0_i32 : i32, i32
  }
  func.func @transform_1(%arg0: i32) -> (i32, i32) {
    %c0_i32 = arith.constant 0 : i32
    %c0_i32_0 = arith.constant 0 : i32
    %c0_i32_1 = arith.constant 0 : i32
    return %c0_i32, %c0_i32_0 : i32, i32
  }
  func.func @transform_2(%arg0: i32) -> (i32, i32) {
    %c0_i32 = arith.constant 0 : i32
    %c0_i32_0 = arith.constant 0 : i32
    %c0_i32_1 = arith.constant 0 : i32
    return %c0_i32, %c0_i32_0 : i32, i32
  }
  func.func @transform_3(%arg0: i32) -> (i32, i32) {
    %c0_i32 = arith.constant 0 : i32
    %c0_i32_0 = arith.constant 0 : i32
    %c0_i32_1 = arith.constant 0 : i32
    return %c0_i32, %c0_i32_0 : i32, i32
  }
  func.func @transform_4(%arg0: i32) -> (i32, i32) {
    %c0_i32 = arith.constant 0 : i32
    %c0_i32_0 = arith.constant 0 : i32
    %c0_i32_1 = arith.constant 0 : i32
    return %c0_i32, %c0_i32_0 : i32, i32
  }
  func.func @transform_5(%arg0: i32) -> (i32, i32) {
    %c0_i32 = arith.constant 0 : i32
    %c0_i32_0 = arith.constant 0 : i32
    %c0_i32_1 = arith.constant 0 : i32
    return %c0_i32, %c0_i32_0 : i32, i32
  }
  func.func @transform_6(%arg0: i32) -> (i32, i32) {
    %c0_i32 = arith.constant 0 : i32
    %c0_i32_0 = arith.constant 0 : i32
    %c0_i32_1 = arith.constant 0 : i32
    return %c0_i32, %c0_i32_0 : i32, i32
  }
  func.func @transform_7(%arg0: i32) -> (i32, i32) {
    %c0_i32 = arith.constant 0 : i32
    %c0_i32_0 = arith.constant 0 : i32
    %c0_i32_1 = arith.constant 0 : i32
    return %c0_i32, %c0_i32_0 : i32, i32
  }
  func.func @transform_8(%arg0: i32) -> (i32, i32) {
    %c0_i32 = arith.constant 0 : i32
    %c0_i32_0 = arith.constant 0 : i32
    %c0_i32_1 = arith.constant 0 : i32
    return %c0_i32, %c0_i32_0 : i32, i32
  }
  func.func @transform_9(%arg0: i32) -> (i32, i32) {
    %c0_i32 = arith.constant 0 : i32
    %c0_i32_0 = arith.constant 0 : i32
    return %arg0, %c0_i32 : i32, i32
  }
}

</mosaic_0001>

<llo_original>
// kernel: tpu_custom_call.1
$region0: #{tpu_custom_call.1}
  #allocation0 [shape = 'u32[]', space=smem, size = 0x4, offset = 0x4, fixed_abs, tag = 'smem constant byte address 0x4 - core index']
  #allocation1 [shape = 'u32[72,128]{1,0:T(1,128)}', space=vmem, size = 0x9000, scoped, tag = 'internal scratch']
  #allocation2 [shape = 'bf16[8,128]{1,0:T(8,128)(2,1)}', space=vmem, size = 0x800, scoped, tag = 'scratch operand']
  %s0 = inlined_call_operand.hbm [shape: bf16[8,128], index: 0, kind: input, shape index: {}]
  %s1 = inlined_call_operand.hbm [shape: bf16[128,128], index: 1, kind: input, shape index: {}]
  %s2 = inlined_call_operand.vmem [shape: f32[1,128], index: 2, kind: input, shape index: {}]
  %s3 = inlined_call_operand.hbm [shape: bf16[128,128], index: 3, kind: input, shape index: {}]
  %s4 = inlined_call_operand.vmem [shape: f32[1,128], index: 4, kind: input, shape index: {}]
  %s5 = inlined_call_operand.hbm [shape: bf16[128,128], index: 5, kind: input, shape index: {}]
  %s6 = inlined_call_operand.vmem [shape: f32[1,128], index: 6, kind: input, shape index: {}]
  %s7 = inlined_call_operand.hbm [shape: bf16[128,128], index: 7, kind: input, shape index: {}]
  %s8 = inlined_call_operand.vmem [shape: f32[1,128], index: 8, kind: input, shape index: {}]
  %s9 = inlined_call_operand.hbm [shape: f32[8,128], index: 9, kind: output, shape index: {}]
  %s10 = sld [smem:[#allocation0]]
  $region66: #{tpu_custom_call.1} parent=0
    _
  %s12 = ssub.s32 1, %s10
  %s13 = scalar_select 0, %s12, %s10
  $region1: #{tpu_custom_call.1} parent=0
    #allocation3 [shape = 'u8[2048]{0}', space=vmem, size = 0x800, scoped, tag = 'input window, operand 0, single buffered']
    #allocation4 [shape = 's32[1]{0}', space=sflag, size = 0x4, scoped, tag = 'scoped memory for tpu_custom_call.1']
    #allocation5 [shape = 's32[1]{0}', space=sflag, size = 0x4, scoped, tag = 'scoped memory for tpu_custom_call.1']
    #allocation6 [shape = 'u8[32768]{0}', space=vmem, size = 0x8000, scoped, tag = 'input window, operand 1, single buffered']
    #allocation7 [shape = 's32[1]{0}', space=sflag, size = 0x4, scoped, tag = 'scoped memory for tpu_custom_call.1']
    #allocation8 [shape = 'u8[32768]{0}', space=vmem, size = 0x8000, scoped, tag = 'input window, operand 3, single buffered']
    #allocation9 [shape = 'u8[32768]{0}', space=vmem, size = 0x8000, scoped, tag = 'input window, operand 5, single buffered']
    #allocation10 [shape = 's32[1]{0}', space=sflag, size = 0x4, scoped, tag = 'scoped memory for tpu_custom_call.1']
    #allocation11 [shape = 'u8[32768]{0}', space=vmem, size = 0x8000, scoped, tag = 'input window, operand 7, single buffered']
    #allocation12 [shape = 'u8[4096]{0}', space=vmem, size = 0x1000, scoped, tag = 'output window, operand 0, single buffered']
    %14 = vsyncpa [#allocation4], 0
    %15 = vsyncpa [#allocation7], 0
    %16 = vsyncpa [#allocation10], 0
    %17 = vsyncpa [#allocation5], 0
    // Predicated region
    $region2: #{tpu_custom_call.1} parent=1 // pred_check
      _
    $region3: #{tpu_custom_call.1} parent=1 // pred_check_branch
      %19 = sbr.rel (0) target = $region5
    $region4: #{tpu_custom_call.1} parent=1 // pred_region
      %21 = vsyncadd [#allocation4], 0
      %s23 = sshll.u32 %s0, 4
      %s24 = int_to_ptr.hbm [resolvable:$true] %s23
      %s25 = sshll.u32 [#allocation3], 4
      %s26 = int_to_ptr.vmem [resolvable:$true] %s25
      %28 = dma.hbm_to_vmem [thread:$0]  %s24, 64, %s26, [#allocation4]
    $region5: #{tpu_custom_call.1} parent=1 // pred_fallthru
      _
    // Predicated region
    $region6: #{tpu_custom_call.1} parent=1 // pred_check
      _
    $region7: #{tpu_custom_call.1} parent=1 // pred_check_branch
      %30 = sbr.rel (0) target = $region9
    $region8: #{tpu_custom_call.1} parent=1 // pred_region
      %32 = vsyncadd [#allocation7], 0
      %s33 = sshll.u32 %s1, 4
      %s34 = int_to_ptr.hbm [resolvable:$true] %s33
      %s35 = sshll.u32 [#allocation6], 4
      %s36 = int_to_ptr.vmem [resolvable:$true] %s35
      %41 = dma.hbm_to_vmem [thread:$0]  %s34, 1024, %s36, [#allocation7], 64, 64, 4
    $region9: #{tpu_custom_call.1} parent=1 // pred_fallthru
      _
    // Predicated region
    $region10: #{tpu_custom_call.1} parent=1 // pred_check
      _
    $region11: #{tpu_custom_call.1} parent=1 // pred_check_branch
      %43 = sbr.rel (0) target = $region13
    $region12: #{tpu_custom_call.1} parent=1 // pred_region
      _
    $region13: #{tpu_custom_call.1} parent=1 // pred_fallthru
      _
    // Predicated region
    $region14: #{tpu_custom_call.1} parent=1 // pred_check
      _
    $region15: #{tpu_custom_call.1} parent=1 // pred_check_branch
      %45 = sbr.rel (0) target = $region17
    $region16: #{tpu_custom_call.1} parent=1 // pred_region
      %47 = vsyncadd [#allocation7], 0
      %s48 = sshll.u32 %s3, 4
      %s49 = int_to_ptr.hbm [resolvable:$true] %s48
      %s50 = sshll.u32 [#allocation8], 4
      %s51 = int_to_ptr.vmem [resolvable:$true] %s50
      %56 = dma.hbm_to_vmem [thread:$0]  %s49, 1024, %s51, [#allocation7], 64, 64, 4
    $region17: #{tpu_custom_call.1} parent=1 // pred_fallthru
      _
    // Predicated region
    $region18: #{tpu_custom_call.1} parent=1 // pred_check
      _
    $region19: #{tpu_custom_call.1} parent=1 // pred_check_branch
      %58 = sbr.rel (0) target = $region21
    $region20: #{tpu_custom_call.1} parent=1 // pred_region
      _
    $region21: #{tpu_custom_call.1} parent=1 // pred_fallthru
      _
    // Predicated region
    $region22: #{tpu_custom_call.1} parent=1 // pred_check
      _
    $region23: #{tpu_custom_call.1} parent=1 // pred_check_branch
      %60 = sbr.rel (0) target = $region25
    $region24: #{tpu_custom_call.1} parent=1 // pred_region
      %62 = vsyncadd [#allocation10], 0
      %s63 = sshll.u32 %s5, 4
      %s64 = int_to_ptr.hbm [resolvable:$true] %s63
      %s65 = sshll.u32 [#allocation9], 4
      %s66 = int_to_ptr.vmem [resolvable:$true] %s65
      %71 = dma.hbm_to_vmem [thread:$0]  %s64, 1024, %s66, [#allocation10], 64, 64, 4
    $region25: #{tpu_custom_call.1} parent=1 // pred_fallthru
      _
    // Predicated region
    $region26: #{tpu_custom_call.1} parent=1 // pred_check
      _
    $region27: #{tpu_custom_call.1} parent=1 // pred_check_branch
      %73 = sbr.rel (0) target = $region29
    $region28: #{tpu_custom_call.1} parent=1 // pred_region
      _
    $region29: #{tpu_custom_call.1} parent=1 // pred_fallthru
      _
    // Predicated region
    $region30: #{tpu_custom_call.1} parent=1 // pred_check
      _
    $region31: #{tpu_custom_call.1} parent=1 // pred_check_branch
      %75 = sbr.rel (0) target = $region33
    $region32: #{tpu_custom_call.1} parent=1 // pred_region
      %77 = vsyncadd [#allocation10], 0
      %s78 = sshll.u32 %s7, 4
      %s79 = int_to_ptr.hbm [resolvable:$true] %s78
      %s80 = sshll.u32 [#allocation11], 4
      %s81 = int_to_ptr.vmem [resolvable:$true] %s80
      %86 = dma.hbm_to_vmem [thread:$0]  %s79, 1024, %s81, [#allocation10], 64, 64, 4
    $region33: #{tpu_custom_call.1} parent=1 // pred_fallthru
      _
    // Predicated region
    $region34: #{tpu_custom_call.1} parent=1 // pred_check
      _
    $region35: #{tpu_custom_call.1} parent=1 // pred_check_branch
      %88 = sbr.rel (0) target = $region37
    $region36: #{tpu_custom_call.1} parent=1 // pred_region
      _
    $region37: #{tpu_custom_call.1} parent=1 // pred_fallthru
      _
    // Predicated region
    $region38: #{tpu_custom_call.1} parent=1 // pred_check
      _
    $region39: #{tpu_custom_call.1} parent=1 // pred_check_branch
      %90 = sbr.rel (0) target = $region41
    $region40: #{tpu_custom_call.1} parent=1 // pred_region
      %92 = dma.done [#allocation4], 64
    $region41: #{tpu_custom_call.1} parent=1 // pred_fallthru
      _
    // Predicated region
    $region42: #{tpu_custom_call.1} parent=1 // pred_check
      _
    $region43: #{tpu_custom_call.1} parent=1 // pred_check_branch
      %94 = sbr.rel (0) target = $region45
    $region44: #{tpu_custom_call.1} parent=1 // pred_region
      %96 = dma.done [#allocation7], 1024
    $region45: #{tpu_custom_call.1} parent=1 // pred_fallthru
      _
    // Predicated region
    $region46: #{tpu_custom_call.1} parent=1 // pred_check
      _
    $region47: #{tpu_custom_call.1} parent=1 // pred_check_branch
      %98 = sbr.rel (0) target = $region49
    $region48: #{tpu_custom_call.1} parent=1 // pred_region
      %100 = dma.done [#allocation7], 1024
    $region49: #{tpu_custom_call.1} parent=1 // pred_fallthru
      _
    // Predicated region
    $region50: #{tpu_custom_call.1} parent=1 // pred_check
      _
    $region51: #{tpu_custom_call.1} parent=1 // pred_check_branch
      %102 = sbr.rel (0) target = $region53
    $region52: #{tpu_custom_call.1} parent=1 // pred_region
      %104 = dma.done [#allocation10], 1024
    $region53: #{tpu_custom_call.1} parent=1 // pred_fallthru
      _
    // Predicated region
    $region54: #{tpu_custom_call.1} parent=1 // pred_check
      _
    $region55: #{tpu_custom_call.1} parent=1 // pred_check_branch
      %106 = sbr.rel (0) target = $region57
    $region56: #{tpu_custom_call.1} parent=1 // pred_region
      %108 = dma.done [#allocation10], 1024
    $region57: #{tpu_custom_call.1} parent=1 // pred_fallthru
      _
    %v109 = vld [vmem:[#allocation3] sm:$0xf]
    %v110 = vld [vmem:[#allocation6] sm:$0xf]
    %v111 = vld [vmem:[#allocation6 + $0x4] sm:$0xf]
    %v112 = vld [vmem:[#allocation6 + $0x8] sm:$0xf]
    %v113 = vld [vmem:[#allocation6 + $0xc] sm:$0xf]
    %v114 = vld [vmem:[#allocation6 + $0x10] sm:$0xf]
    %v115 = vld [vmem:[#allocation6 + $0x14] sm:$0xf]
    %v116 = vld [vmem:[#allocation6 + $0x18] sm:$0xf]
    %v117 = vld [vmem:[#allocation6 + $0x1c] sm:$0xf]
    %v118 = vld [vmem:[#allocation6 + $0x20] sm:$0xf]
    %v119 = vld [vmem:[#allocation6 + $0x24] sm:$0xf]
    %v120 = vld [vmem:[#allocation6 + $0x28] sm:$0xf]
    %v121 = vld [vmem:[#allocation6 + $0x2c] sm:$0xf]
    %v122 = vld [vmem:[#allocation6 + $0x30] sm:$0xf]
    %v123 = vld [vmem:[#allocation6 + $0x34] sm:$0xf]
    %v124 = vld [vmem:[#allocation6 + $0x38] sm:$0xf]
    %v125 = vld [vmem:[#allocation6 + $0x3c] sm:$0xf]
    %v126 = vld [vmem:[%s2] sm:$0x1]
    %v128 = vperm.slane %v126, 0
    %v146 = vunpack.c.l.b16 %v110
    %v147 = vunpack.c.l.b16 %v111
    %v148 = vunpack.c.l.b16 %v112
    %v149 = vunpack.c.l.b16 %v113
    %v150 = vunpack.c.l.b16 %v114
    %v151 = vunpack.c.l.b16 %v115
    %v152 = vunpack.c.l.b16 %v116
    %v153 = vunpack.c.l.b16 %v117
    %v154 = vunpack.c.l.b16 %v118
    %v155 = vunpack.c.l.b16 %v119
    %v156 = vunpack.c.l.b16 %v120
    %v157 = vunpack.c.l.b16 %v121
    %v158 = vunpack.c.l.b16 %v122
    %v159 = vunpack.c.l.b16 %v123
    %v160 = vunpack.c.l.b16 %v124
    %v161 = vunpack.c.l.b16 %v125
    %v162 = vpack.c.b16 %v147, %v146
    %v163 = vpack.c.b16 %v149, %v148
    %v164 = vpack.c.b16 %v151, %v150
    %v165 = vpack.c.b16 %v153, %v152
    %v166 = vpack.c.b16 %v155, %v154
    %v167 = vpack.c.b16 %v157, %v156
    %v168 = vpack.c.b16 %v159, %v158
    %v169 = vpack.c.b16 %v161, %v160
    %178 = vmatpush.bf16.msra.mxu0 %v169
    %179 = vmatpush.bf16.msra.mxu0 %v168
    %180 = vmatpush.bf16.msra.mxu0 %v167
    %181 = vmatpush.bf16.msra.mxu0 %v166
    %182 = vmatpush.bf16.msra.mxu0 %v165
    %183 = vmatpush.bf16.msra.mxu0 %v164
    %184 = vmatpush.bf16.msra.mxu0 %v163
    %185 = vmatpush.bf16.msra.mxu0 %v162
    %186 = vmatmul.bf16.gmra.mxu0 %v109
    %v187 = vpop.f32.mrf.mxu0
    %v188 = vadd.f32 %v128, %v187
    %v189 = vpop.f32.mrf.mxu0
    %190 = vdwg.mxu0
    %v191 = vtanh.pop %v188
    %v192 = vpack.c.bf16 %v191, %v191
    %193 = vst [vmem:[#allocation2] sm:$0xf] %v192
    %v194 = vld [vmem:[#allocation2] sm:$0xf]
    %v195 = vld [vmem:[#allocation8] sm:$0xf]
    %v196 = vld [vmem:[#allocation8 + $0x4] sm:$0xf]
    %v197 = vld [vmem:[#allocation8 + $0x8] sm:$0xf]
    %v198 = vld [vmem:[#allocation8 + $0xc] sm:$0xf]
    %v199 = vld [vmem:[#allocation8 + $0x10] sm:$0xf]
    %v200 = vld [vmem:[#allocation8 + $0x14] sm:$0xf]
    %v201 = vld [vmem:[#allocation8 + $0x18] sm:$0xf]
    %v202 = vld [vmem:[#allocation8 + $0x1c] sm:$0xf]
    %v203 = vld [vmem:[#allocation8 + $0x20] sm:$0xf]
    %v204 = vld [vmem:[#allocation8 + $0x24] sm:$0xf]
    %v205 = vld [vmem:[#allocation8 + $0x28] sm:$0xf]
    %v206 = vld [vmem:[#allocation8 + $0x2c] sm:$0xf]
    %v207 = vld [vmem:[#allocation8 + $0x30] sm:$0xf]
    %v208 = vld [vmem:[#allocation8 + $0x34] sm:$0xf]
    %v209 = vld [vmem:[#allocation8 + $0x38] sm:$0xf]
    %v210 = vld [vmem:[#allocation8 + $0x3c] sm:$0xf]
    %v211 = vld [vmem:[%s4] sm:$0x1]
    %v213 = vperm.slane %v211, 0
    %v231 = vunpack.c.l.b16 %v195
    %v232 = vunpack.c.l.b16 %v196
    %v233 = vunpack.c.l.b16 %v197
    %v234 = vunpack.c.l.b16 %v198
    %v235 = vunpack.c.l.b16 %v199
    %v236 = vunpack.c.l.b16 %v200
    %v237 = vunpack.c.l.b16 %v201
    %v238 = vunpack.c.l.b16 %v202
    %v239 = vunpack.c.l.b16 %v203
    %v240 = vunpack.c.l.b16 %v204
    %v241 = vunpack.c.l.b16 %v205
    %v242 = vunpack.c.l.b16 %v206
    %v243 = vunpack.c.l.b16 %v207
    %v244 = vunpack.c.l.b16 %v208
    %v245 = vunpack.c.l.b16 %v209
    %v246 = vunpack.c.l.b16 %v210
    %v247 = vpack.c.b16 %v232, %v231
    %v248 = vpack.c.b16 %v234, %v233
    %v249 = vpack.c.b16 %v236, %v235
    %v250 = vpack.c.b16 %v238, %v237
    %v251 = vpack.c.b16 %v240, %v239
    %v252 = vpack.c.b16 %v242, %v241
    %v253 = vpack.c.b16 %v244, %v243
    %v254 = vpack.c.b16 %v246, %v245
    %263 = vmatpush.bf16.msra.mxu0 %v254
    %264 = vmatpush.bf16.msra.mxu0 %v253
    %265 = vmatpush.bf16.msra.mxu0 %v252
    %266 = vmatpush.bf16.msra.mxu0 %v251
    %267 = vmatpush.bf16.msra.mxu0 %v250
    %268 = vmatpush.bf16.msra.mxu0 %v249
    %269 = vmatpush.bf16.msra.mxu0 %v248
    %270 = vmatpush.bf16.msra.mxu0 %v247
    %271 = vmatmul.bf16.gmra.mxu0 %v194
    %v272 = vpop.f32.mrf.mxu0
    %v273 = vadd.f32 %v213, %v272
    %v274 = vpop.f32.mrf.mxu0
    %275 = vdwg.mxu0
    %v276 = vtanh.pop %v273
    %v277 = vpack.c.bf16 %v276, %v276
    %278 = vst [vmem:[#allocation2] sm:$0xf] %v277
    %v279 = vld [vmem:[#allocation2] sm:$0xf]
    %v280 = vld [vmem:[#allocation9] sm:$0xf]
    %v281 = vld [vmem:[#allocation9 + $0x4] sm:$0xf]
    %v282 = vld [vmem:[#allocation9 + $0x8] sm:$0xf]
    %v283 = vld [vmem:[#allocation9 + $0xc] sm:$0xf]
    %v284 = vld [vmem:[#allocation9 + $0x10] sm:$0xf]
    %v285 = vld [vmem:[#allocation9 + $0x14] sm:$0xf]
    %v286 = vld [vmem:[#allocation9 + $0x18] sm:$0xf]
    %v287 = vld [vmem:[#allocation9 + $0x1c] sm:$0xf]
    %v288 = vld [vmem:[#allocation9 + $0x20] sm:$0xf]
    %v289 = vld [vmem:[#allocation9 + $0x24] sm:$0xf]
    %v290 = vld [vmem:[#allocation9 + $0x28] sm:$0xf]
    %v291 = vld [vmem:[#allocation9 + $0x2c] sm:$0xf]
    %v292 = vld [vmem:[#allocation9 + $0x30] sm:$0xf]
    %v293 = vld [vmem:[#allocation9 + $0x34] sm:$0xf]
    %v294 = vld [vmem:[#allocation9 + $0x38] sm:$0xf]
    %v295 = vld [vmem:[#allocation9 + $0x3c] sm:$0xf]
    %v296 = vld [vmem:[%s6] sm:$0x1]
    %v298 = vperm.slane %v296, 0
    %v316 = vunpack.c.l.b16 %v280
    %v317 = vunpack.c.l.b16 %v281
    %v318 = vunpack.c.l.b16 %v282
    %v319 = vunpack.c.l.b16 %v283
    %v320 = vunpack.c.l.b16 %v284
    %v321 = vunpack.c.l.b16 %v285
    %v322 = vunpack.c.l.b16 %v286
    %v323 = vunpack.c.l.b16 %v287
    %v324 = vunpack.c.l.b16 %v288
    %v325 = vunpack.c.l.b16 %v289
    %v326 = vunpack.c.l.b16 %v290
    %v327 = vunpack.c.l.b16 %v291
    %v328 = vunpack.c.l.b16 %v292
    %v329 = vunpack.c.l.b16 %v293
    %v330 = vunpack.c.l.b16 %v294
    %v331 = vunpack.c.l.b16 %v295
    %v332 = vpack.c.b16 %v317, %v316
    %v333 = vpack.c.b16 %v319, %v318
    %v334 = vpack.c.b16 %v321, %v320
    %v335 = vpack.c.b16 %v323, %v322
    %v336 = vpack.c.b16 %v325, %v324
    %v337 = vpack.c.b16 %v327, %v326
    %v338 = vpack.c.b16 %v329, %v328
    %v339 = vpack.c.b16 %v331, %v330
    %348 = vmatpush.bf16.msra.mxu0 %v339
    %349 = vmatpush.bf16.msra.mxu0 %v338
    %350 = vmatpush.bf16.msra.mxu0 %v337
    %351 = vmatpush.bf16.msra.mxu0 %v336
    %352 = vmatpush.bf16.msra.mxu0 %v335
    %353 = vmatpush.bf16.msra.mxu0 %v334
    %354 = vmatpush.bf16.msra.mxu0 %v333
    %355 = vmatpush.bf16.msra.mxu0 %v332
    %356 = vmatmul.bf16.gmra.mxu0 %v279
    %v357 = vpop.f32.mrf.mxu0
    %v358 = vadd.f32 %v298, %v357
    %v359 = vpop.f32.mrf.mxu0
    %360 = vdwg.mxu0
    %v361 = vtanh.pop %v358
    %v362 = vpack.c.bf16 %v361, %v361
    %363 = vst [vmem:[#allocation2] sm:$0xf] %v362
    %v364 = vld [vmem:[#allocation2] sm:$0xf]
    %v365 = vld [vmem:[#allocation11] sm:$0xf]
    %v366 = vld [vmem:[#allocation11 + $0x4] sm:$0xf]
    %v367 = vld [vmem:[#allocation11 + $0x8] sm:$0xf]
    %v368 = vld [vmem:[#allocation11 + $0xc] sm:$0xf]
    %v369 = vld [vmem:[#allocation11 + $0x10] sm:$0xf]
    %v370 = vld [vmem:[#allocation11 + $0x14] sm:$0xf]
    %v371 = vld [vmem:[#allocation11 + $0x18] sm:$0xf]
    %v372 = vld [vmem:[#allocation11 + $0x1c] sm:$0xf]
    %v373 = vld [vmem:[#allocation11 + $0x20] sm:$0xf]
    %v374 = vld [vmem:[#allocation11 + $0x24] sm:$0xf]
    %v375 = vld [vmem:[#allocation11 + $0x28] sm:$0xf]
    %v376 = vld [vmem:[#allocation11 + $0x2c] sm:$0xf]
    %v377 = vld [vmem:[#allocation11 + $0x30] sm:$0xf]
    %v378 = vld [vmem:[#allocation11 + $0x34] sm:$0xf]
    %v379 = vld [vmem:[#allocation11 + $0x38] sm:$0xf]
    %v380 = vld [vmem:[#allocation11 + $0x3c] sm:$0xf]
    %v381 = vld [vmem:[%s8] sm:$0x1]
    %v383 = vperm.slane %v381, 0
    %v401 = vunpack.c.l.b16 %v365
    %v402 = vunpack.c.l.b16 %v366
    %v403 = vunpack.c.l.b16 %v367
    %v404 = vunpack.c.l.b16 %v368
    %v405 = vunpack.c.l.b16 %v369
    %v406 = vunpack.c.l.b16 %v370
    %v407 = vunpack.c.l.b16 %v371
    %v408 = vunpack.c.l.b16 %v372
    %v409 = vunpack.c.l.b16 %v373
    %v410 = vunpack.c.l.b16 %v374
    %v411 = vunpack.c.l.b16 %v375
    %v412 = vunpack.c.l.b16 %v376
    %v413 = vunpack.c.l.b16 %v377
    %v414 = vunpack.c.l.b16 %v378
    %v415 = vunpack.c.l.b16 %v379
    %v416 = vunpack.c.l.b16 %v380
    %v417 = vpack.c.b16 %v402, %v401
    %v418 = vpack.c.b16 %v404, %v403
    %v419 = vpack.c.b16 %v406, %v405
    %v420 = vpack.c.b16 %v408, %v407
    %v421 = vpack.c.b16 %v410, %v409
    %v422 = vpack.c.b16 %v412, %v411
    %v423 = vpack.c.b16 %v414, %v413
    %v424 = vpack.c.b16 %v416, %v415
    %433 = vmatpush.bf16.msra.mxu0 %v424
    %434 = vmatpush.bf16.msra.mxu0 %v423
    %435 = vmatpush.bf16.msra.mxu0 %v422
    %436 = vmatpush.bf16.msra.mxu0 %v421
    %437 = vmatpush.bf16.msra.mxu0 %v420
    %438 = vmatpush.bf16.msra.mxu0 %v419
    %439 = vmatpush.bf16.msra.mxu0 %v418
    %440 = vmatpush.bf16.msra.mxu0 %v417
    %441 = vmatmul.bf16.gmra.mxu0 %v364
    %v442 = vpop.f32.mrf.mxu0
    %v443 = vadd.f32 %v383, %v442
    %v444 = vpop.f32.mrf.mxu0
    %445 = vdwg.mxu0
    %446 = vst [vmem:[#allocation12] sm:$0xff] %v443
    // Predicated region
    $region58: #{tpu_custom_call.1} parent=1 // pred_check
      _
    $region59: #{tpu_custom_call.1} parent=1 // pred_check_branch
      %448 = sbr.rel (0) target = $region61
    $region60: #{tpu_custom_call.1} parent=1 // pred_region
      %450 = vsyncadd [#allocation5], 0
      %s452 = sshll.u32 [#allocation12], 4
      %s453 = int_to_ptr.vmem [resolvable:$true] %s452
      %s454 = sshll.u32 %s9, 4
      %s455 = int_to_ptr.hbm [resolvable:$true] %s454
      %457 = dma.vmem_to_hbm [thread:$0]  %s453, 128, %s455, [#allocation5]
    $region61: #{tpu_custom_call.1} parent=1 // pred_fallthru
      _
    // Predicated region
    $region62: #{tpu_custom_call.1} parent=1 // pred_check
      _
    $region63: #{tpu_custom_call.1} parent=1 // pred_check_branch
      %459 = sbr.rel (0) target = $region65
    $region64: #{tpu_custom_call.1} parent=1 // pred_region
      %461 = dma.done [#allocation5], 128
    $region65: #{tpu_custom_call.1} parent=1 // pred_fallthru
      _
    %462 = vsyncpa [#allocation4], 1
    %463 = vsyncpa [#allocation7], 1
    %464 = vsyncpa [#allocation10], 1
    %465 = vsyncpa [#allocation5], 1

</llo_original>
